<compile_context>
chip_gen: v7x
topology: tpu7x:2x2x1
jax: 0.10.0
libtpu: 0.0.40
codegen_flags: <defaults>
</compile_context>

<pallas_src>
import jax
import jax.numpy as jnp
from jax.experimental import pallas as pl
from jax.experimental.pallas import tpu as pltpu

IDENT   = ((0.0, 0.0, 0.0), (0.0, 1.0, 0.0), (0.0, 0.0, 0.0))
SOBEL_X = ((-1.0, 0.0, 1.0), (-2.0, 0.0, 2.0), (-1.0, 0.0, 1.0))
SOBEL_Y = tuple(zip(*SOBEL_X))  # sobel_x.T
LAP     = ((1.0, 2.0, 1.0), (2.0, -12.0, 2.0), (1.0, 2.0, 1.0))
FILTERS = (IDENT, SOBEL_X, SOBEL_Y, LAP)


def _make_ca_kernel(B, C, H, W, update_rate, compute_dtype):
    HW = H * W

    def kernel(x_ref, rand_ref, w1_ref, b1_ref, w2_ref, out_ref):
        # x_ref:(B,C,HW)  rand_ref:(B,1,HW)  w1_ref:(hidden,9C)  b1_ref:(hidden,1)
        # w2_ref:(C,hidden)  out_ref:(B,C,HW)
        w1e = w1_ref[...]
        b1  = b1_ref[...]
        w2  = w2_ref[...]

        # Lane-position masks for the circular wrap along W.  The flat index is h*W + w,
        # so an H-shift is a plain flat roll by +-W, while a W-shift is a flat roll by
        # +-1 everywhere except the row-boundary columns, which take a second roll.
        col = jax.lax.broadcasted_iota(jnp.int32, (C, HW), 1)
        if (W & (W - 1)) == 0:
            wpos = jax.lax.bitwise_and(col, W - 1)
        else:
            wpos = col % W
        is_first_col = wpos == 0
        is_last_col  = wpos == (W - 1)

        for b in range(B):                       # B is tiny & static
            x = x_ref[b]                         # (C, HW) float32

            # Circular shift along W:  xw0[:, h, w] = x[:, h, (w-1) % W]
            #                          xw2[:, h, w] = x[:, h, (w+1) % W]
            xw0 = jnp.where(is_first_col,
                            pltpu.roll(x, HW - W + 1, axis=1),
                            pltpu.roll(x, 1, axis=1))
            xw2 = jnp.where(is_last_col,
                            pltpu.roll(x, W - 1, axis=1),
                            pltpu.roll(x, HW - 1, axis=1))
            xw = (xw0, x, xw2)

            # Circular shift along H == roll of the flattened H*W axis by +-W.
            # views[di*3 + dj][c, h*W + w] = x[c, (h+di-1)%H, (w+dj-1)%W]
            views = []
            for di in range(3):
                sh = ((1 - di) * W) % HW
                for dj in range(3):
                    v = xw[dj] if sh == 0 else pltpu.roll(xw[dj], sh, axis=1)
                    views.append(v)
            yfold = jnp.concatenate(views, axis=0)          # (9C, HW), row = tap*C + c

            # perception + both 1x1 convs as two lane-dense MXU matmuls.
            yc = yfold.astype(compute_dtype)
            h = jnp.dot(w1e, yc, preferred_element_type=jnp.float32) + b1   # (hidden, HW)
            h = jnp.maximum(h, 0.0)
            dx = jnp.dot(w2, h.astype(compute_dtype),
                         preferred_element_type=jnp.float32)                # (C, HW)

            mask = jnp.floor(rand_ref[b] + update_rate)     # (1, HW), broadcasts over C
            out_ref[b] = x + dx * mask

    return kernel


def prepare_ca_params(w1, b1, w2, chn, compute_dtype=jnp.float32):
    """Fold the fixed 3x3 filter bank into w1 and lay weights out for the kernel.
    Call ONCE and reuse across CA iterations (hoisted out of the per-step path).
      w1: (hidden, 4*chn) torch 1x1-conv weight, input index c*4 + f
      b1: (hidden,)
      w2: (chn, hidden)
    Returns (w1_eff (hidden, 9*chn), b1 (hidden, 1) f32, w2 (chn, hidden))."""
    hidden = w1.shape[0]
    filt = jnp.array(FILTERS, dtype=jnp.float32)                   # (4, 3, 3)
    w1_r = w1.astype(jnp.float32).reshape(hidden, chn, 4)          # [o, c, f]
    # w1_eff[o, (di*3+dj)*chn + c] = sum_f w1[o, c*4+f] * filt[f, di, dj]
    w1_eff = jnp.einsum("ocf,fij->oijc", w1_r, filt).reshape(hidden, 9 * chn)
    return (w1_eff.astype(compute_dtype),
            b1.astype(jnp.float32).reshape(hidden, 1),
            w2.astype(compute_dtype))


def ca_step_pallas(x_nchw, params, rand_u, update_rate=0.5):
    """One CA step.  x_nchw: (B, C, H, W);  params from prepare_ca_params();
    rand_u: (B, 1, H, W) uniform [0,1) (kept as an input for bit-exact parity)."""
    B, C, H, W = x_nchw.shape
    HW = H * W
    w1_eff, b1_k, w2_k = params
    compute_dtype = w1_eff.dtype

    x2 = x_nchw.astype(jnp.float32).reshape(B, C, HW)      # pure reshape, no transpose/pad
    rand2 = rand_u.astype(jnp.float32).reshape(B, 1, HW)   # lane-dense mask source

    kernel = _make_ca_kernel(B, C, H, W, float(update_rate), compute_dtype)
    out = pl.pallas_call(
        kernel,
        out_shape=jax.ShapeDtypeStruct((B, C, HW), jnp.float32),
    )(x2, rand2, w1_eff, b1_k, w2_k)
    return out.reshape(B, C, H, W)


def ca_forward_reference(x_nchw, w1, b1, w2, rand_u, update_rate=0.5):
    """Pure-JAX reference matching the PyTorch forward, for validation."""
    B, C, H, W = x_nchw.shape
    xpad = jnp.pad(x_nchw, ((0, 0), (0, 0), (1, 1), (1, 1)), mode="wrap")
    filt = jnp.array(FILTERS, dtype=jnp.float32)  # (4, 3, 3)
    outs = []
    for c in range(C):           # perchannel_conv channel order: c*4 + f
        for f in range(4):
            acc = jnp.zeros((B, H, W), jnp.float32)
            for di in range(3):
                for dj in range(3):
                    acc = acc + filt[f, di, dj] * xpad[:, c, di:di + H, dj:dj + W]
            outs.append(acc)
    y = jnp.stack(outs, axis=1)                                  # (B, 4C, H, W)
    y = jnp.einsum("bchw,oc->bohw", y, w1) + b1[None, :, None, None]
    y = jnp.maximum(y, 0.0)
    y = jnp.einsum("bchw,oc->bohw", y, w2)
    mask = jnp.floor(rand_u + update_rate)                       # (B, 1, H, W)
    return x_nchw + y * mask


if __name__ == "__main__":
    chn, hidden_n = 12, 96     # CA defaults
    B, H, W = 2, 16, 16

    key = jax.random.PRNGKey(0)
    kx, kw1, kb1, kw2, kr = jax.random.split(key, 5)

    x = jax.random.normal(kx, (B, chn, H, W), dtype=jnp.float32)
    # Deterministic synthetic parameters. NOTE: the PyTorch module zero-inits w2;
    # here w2 is given small random values so the kernel path is non-trivial.
    w1 = 0.1 * jax.random.normal(kw1, (hidden_n, chn * 4), dtype=jnp.float32)
    b1 = 0.1 * jax.random.normal(kb1, (hidden_n,), dtype=jnp.float32)
    w2 = 0.1 * jax.random.normal(kw2, (chn, hidden_n), dtype=jnp.float32)
    rand_u = jax.random.uniform(kr, (B, 1, H, W), dtype=jnp.float32)

    ref = ca_forward_reference(x, w1, b1, w2, rand_u, update_rate=0.5)

    # --- f32 path: weight prep hoisted (done once), then the per-step pallas kernel ---
    params_f32 = prepare_ca_params(w1, b1, w2, chn, compute_dtype=jnp.float32)
    step_f32 = jax.jit(lambda xx, rr: ca_step_pallas(xx, params_f32, rr, update_rate=0.5))
    out = jax.block_until_ready(step_f32(x, rand_u))
    assert out.shape == (B, chn, H, W)
    assert jnp.allclose(out, ref, atol=5e-4, rtol=5e-4), "f32 mismatch vs reference"

    # --- bf16 MXU path (perf-review item): bf16 operands, f32 accumulation ---
    params_bf16 = prepare_ca_params(w1, b1, w2, chn, compute_dtype=jnp.bfloat16)
    step_bf16 = jax.jit(lambda xx, rr: ca_step_pallas(xx, params_bf16, rr, update_rate=0.5))
    out_bf16 = jax.block_until_ready(step_bf16(x, rand_u))
    # Loose smoke-check: bf16-rounded matmul operands, f32 accumulation.
    assert jnp.allclose(out_bf16, ref, atol=0.5, rtol=0.0), "bf16 path mismatch"

    print("KERNEL_OK")
</pallas_src>

<mosaic_0001>
module attributes {stable_mosaic.version = 11 : i64} {
  func.func @kernel(%arg0: memref<2x12x256xf32, #tpu.memory_space<vmem>>, %arg1: memref<2x1x256xf32, #tpu.memory_space<vmem>>, %arg2: memref<96x108xf32, #tpu.memory_space<vmem>>, %arg3: memref<96x1xf32, #tpu.memory_space<vmem>>, %arg4: memref<12x96xf32, #tpu.memory_space<vmem>>, %arg5: memref<2x12x256xf32, #tpu.memory_space<vmem>>) attributes {dimension_semantics = [], scalar_prefetch = 0 : i64, scratch_operands = 0 : i64, tpu.core_type = #tpu.core_type<tc>} {
    %c0 = arith.constant 0 : index
    %c0_0 = arith.constant 0 : index
    %0 = vector.load %arg2[%c0, %c0_0] : memref<96x108xf32, #tpu.memory_space<vmem>>, vector<96x108xf32>
    %c0_1 = arith.constant 0 : index
    %c0_2 = arith.constant 0 : index
    %1 = vector.load %arg3[%c0_1, %c0_2] : memref<96x1xf32, #tpu.memory_space<vmem>>, vector<96x1xf32>
    %c0_3 = arith.constant 0 : index
    %c0_4 = arith.constant 0 : index
    %2 = vector.load %arg4[%c0_3, %c0_4] : memref<12x96xf32, #tpu.memory_space<vmem>>, vector<12x96xf32>
    %3 = tpu.iota {dimensions = array<i32: 1>} : vector<12x256xi32>
    %c15_i32 = arith.constant 15 : i32
    %4 = vector.broadcast %c15_i32 : i32 to vector<12x256xi32>
    %5 = arith.andi %3, %4 : vector<12x256xi32>
    %c0_i32 = arith.constant 0 : i32
    %6 = vector.broadcast %c0_i32 : i32 to vector<12x256xi32>
    %7 = arith.cmpi eq, %5, %6 : vector<12x256xi32>
    %c15_i32_5 = arith.constant 15 : i32
    %8 = vector.broadcast %c15_i32_5 : i32 to vector<12x256xi32>
    %9 = arith.cmpi eq, %5, %8 : vector<12x256xi32>
    %c0_6 = arith.constant 0 : index
    %c0_7 = arith.constant 0 : index
    %c0_8 = arith.constant 0 : index
    %10 = vector.load %arg0[%c0_6, %c0_7, %c0_8] : memref<2x12x256xf32, #tpu.memory_space<vmem>>, vector<1x12x256xf32>
    %11 = vector.shape_cast %10 : vector<1x12x256xf32> to vector<12x256xf32>
    %c241_i32 = arith.constant 241 : i32
    %12 = tpu.dynamic_rotate %11 by %c241_i32 dim 1 : vector<12x256xf32>, i32 -> vector<12x256xf32>
    %c1_i32 = arith.constant 1 : i32
    %13 = tpu.dynamic_rotate %11 by %c1_i32 dim 1 : vector<12x256xf32>, i32 -> vector<12x256xf32>
    %14 = arith.select %7, %12, %13 : vector<12x256xi1>, vector<12x256xf32>
    %c15_i32_9 = arith.constant 15 : i32
    %15 = tpu.dynamic_rotate %11 by %c15_i32_9 dim 1 : vector<12x256xf32>, i32 -> vector<12x256xf32>
    %c255_i32 = arith.constant 255 : i32
    %16 = tpu.dynamic_rotate %11 by %c255_i32 dim 1 : vector<12x256xf32>, i32 -> vector<12x256xf32>
    %17 = arith.select %9, %15, %16 : vector<12x256xi1>, vector<12x256xf32>
    %c16_i32 = arith.constant 16 : i32
    %18 = tpu.dynamic_rotate %14 by %c16_i32 dim 1 : vector<12x256xf32>, i32 -> vector<12x256xf32>
    %c16_i32_10 = arith.constant 16 : i32
    %19 = tpu.dynamic_rotate %11 by %c16_i32_10 dim 1 : vector<12x256xf32>, i32 -> vector<12x256xf32>
    %c16_i32_11 = arith.constant 16 : i32
    %20 = tpu.dynamic_rotate %17 by %c16_i32_11 dim 1 : vector<12x256xf32>, i32 -> vector<12x256xf32>
    %c240_i32 = arith.constant 240 : i32
    %21 = tpu.dynamic_rotate %14 by %c240_i32 dim 1 : vector<12x256xf32>, i32 -> vector<12x256xf32>
    %c240_i32_12 = arith.constant 240 : i32
    %22 = tpu.dynamic_rotate %11 by %c240_i32_12 dim 1 : vector<12x256xf32>, i32 -> vector<12x256xf32>
    %c240_i32_13 = arith.constant 240 : i32
    %23 = tpu.dynamic_rotate %17 by %c240_i32_13 dim 1 : vector<12x256xf32>, i32 -> vector<12x256xf32>
    %24 = tpu.concatenate %18, %19, %20, %14, %11, %17, %21, %22, %23 in 0 : vector<12x256xf32>, vector<12x256xf32>, vector<12x256xf32>, vector<12x256xf32>, vector<12x256xf32>, vector<12x256xf32>, vector<12x256xf32>, vector<12x256xf32>, vector<12x256xf32> -> vector<108x256xf32>
    %cst = arith.constant dense<0.000000e+00> : vector<96x256xf32>
    %25 = tpu.matmul %0, %24, %cst {dimension_numbers = #tpu.dot_dimension_numbers<[1], [0], [0], [1], [0, 0, 1, 1], [], []>} : vector<96x108xf32>, vector<108x256xf32>, vector<96x256xf32> -> vector<96x256xf32>
    %26 = vector.broadcast %1 : vector<96x1xf32> to vector<96x256xf32>
    %27 = arith.addf %25, %26 : vector<96x256xf32>
    %cst_14 = arith.constant 0.000000e+00 : f32
    %28 = vector.broadcast %cst_14 : f32 to vector<96x256xf32>
    %29 = arith.maximumf %27, %28 : vector<96x256xf32>
    %cst_15 = arith.constant dense<0.000000e+00> : vector<12x256xf32>
    %30 = tpu.matmul %2, %29, %cst_15 {dimension_numbers = #tpu.dot_dimension_numbers<[1], [0], [0], [1], [0, 0, 1, 1], [], []>} : vector<12x96xf32>, vector<96x256xf32>, vector<12x256xf32> -> vector<12x256xf32>
    %c0_16 = arith.constant 0 : index
    %c0_17 = arith.constant 0 : index
    %c0_18 = arith.constant 0 : index
    %31 = vector.load %arg1[%c0_16, %c0_17, %c0_18] : memref<2x1x256xf32, #tpu.memory_space<vmem>>, vector<1x1x256xf32>
    %32 = vector.shape_cast %31 : vector<1x1x256xf32> to vector<1x256xf32>
    %cst_19 = arith.constant 5.000000e-01 : f32
    %33 = vector.broadcast %cst_19 : f32 to vector<1x256xf32>
    %34 = arith.addf %32, %33 : vector<1x256xf32>
    %35 = math.floor %34 : vector<1x256xf32>
    %36 = vector.broadcast %35 : vector<1x256xf32> to vector<12x256xf32>
    %37 = arith.mulf %30, %36 : vector<12x256xf32>
    %38 = arith.addf %11, %37 : vector<12x256xf32>
    %c0_20 = arith.constant 0 : index
    %c0_21 = arith.constant 0 : index
    %c0_22 = arith.constant 0 : index
    %39 = vector.load %arg5[%c0_20, %c0_21, %c0_22] : memref<2x12x256xf32, #tpu.memory_space<vmem>>, vector<1x12x256xf32>
    %40 = vector.shape_cast %39 : vector<1x12x256xf32> to vector<12x256xf32>
    %41 = vector.shape_cast %38 : vector<12x256xf32> to vector<1x12x256xf32>
    tpu.vector_store %arg5[%c0_20, %c0_21, %c0_22], %41 {strides = array<i32>} : memref<2x12x256xf32, #tpu.memory_space<vmem>>, vector<1x12x256xf32>,
    %c1 = arith.constant 1 : index
    %c0_23 = arith.constant 0 : index
    %c0_24 = arith.constant 0 : index
    %42 = vector.load %arg0[%c1, %c0_23, %c0_24] : memref<2x12x256xf32, #tpu.memory_space<vmem>>, vector<1x12x256xf32>
    %43 = vector.shape_cast %42 : vector<1x12x256xf32> to vector<12x256xf32>
    %c241_i32_25 = arith.constant 241 : i32
    %44 = tpu.dynamic_rotate %43 by %c241_i32_25 dim 1 : vector<12x256xf32>, i32 -> vector<12x256xf32>
    %c1_i32_26 = arith.constant 1 : i32
    %45 = tpu.dynamic_rotate %43 by %c1_i32_26 dim 1 : vector<12x256xf32>, i32 -> vector<12x256xf32>
    %46 = arith.select %7, %44, %45 : vector<12x256xi1>, vector<12x256xf32>
    %c15_i32_27 = arith.constant 15 : i32
    %47 = tpu.dynamic_rotate %43 by %c15_i32_27 dim 1 : vector<12x256xf32>, i32 -> vector<12x256xf32>
    %c255_i32_28 = arith.constant 255 : i32
    %48 = tpu.dynamic_rotate %43 by %c255_i32_28 dim 1 : vector<12x256xf32>, i32 -> vector<12x256xf32>
    %49 = arith.select %9, %47, %48 : vector<12x256xi1>, vector<12x256xf32>
    %c16_i32_29 = arith.constant 16 : i32
    %50 = tpu.dynamic_rotate %46 by %c16_i32_29 dim 1 : vector<12x256xf32>, i32 -> vector<12x256xf32>
    %c16_i32_30 = arith.constant 16 : i32
    %51 = tpu.dynamic_rotate %43 by %c16_i32_30 dim 1 : vector<12x256xf32>, i32 -> vector<12x256xf32>
    %c16_i32_31 = arith.constant 16 : i32
    %52 = tpu.dynamic_rotate %49 by %c16_i32_31 dim 1 : vector<12x256xf32>, i32 -> vector<12x256xf32>
    %c240_i32_32 = arith.constant 240 : i32
    %53 = tpu.dynamic_rotate %46 by %c240_i32_32 dim 1 : vector<12x256xf32>, i32 -> vector<12x256xf32>
    %c240_i32_33 = arith.constant 240 : i32
    %54 = tpu.dynamic_rotate %43 by %c240_i32_33 dim 1 : vector<12x256xf32>, i32 -> vector<12x256xf32>
    %c240_i32_34 = arith.constant 240 : i32
    %55 = tpu.dynamic_rotate %49 by %c240_i32_34 dim 1 : vector<12x256xf32>, i32 -> vector<12x256xf32>
    %56 = tpu.concatenate %50, %51, %52, %46, %43, %49, %53, %54, %55 in 0 : vector<12x256xf32>, vector<12x256xf32>, vector<12x256xf32>, vector<12x256xf32>, vector<12x256xf32>, vector<12x256xf32>, vector<12x256xf32>, vector<12x256xf32>, vector<12x256xf32> -> vector<108x256xf32>
    %cst_35 = arith.constant dense<0.000000e+00> : vector<96x256xf32>
    %57 = tpu.matmul %0, %56, %cst_35 {dimension_numbers = #tpu.dot_dimension_numbers<[1], [0], [0], [1], [0, 0, 1, 1], [], []>} : vector<96x108xf32>, vector<108x256xf32>, vector<96x256xf32> -> vector<96x256xf32>
    %58 = vector.broadcast %1 : vector<96x1xf32> to vector<96x256xf32>
    %59 = arith.addf %57, %58 : vector<96x256xf32>
    %cst_36 = arith.constant 0.000000e+00 : f32
    %60 = vector.broadcast %cst_36 : f32 to vector<96x256xf32>
    %61 = arith.maximumf %59, %60 : vector<96x256xf32>
    %cst_37 = arith.constant dense<0.000000e+00> : vector<12x256xf32>
    %62 = tpu.matmul %2, %61, %cst_37 {dimension_numbers = #tpu.dot_dimension_numbers<[1], [0], [0], [1], [0, 0, 1, 1], [], []>} : vector<12x96xf32>, vector<96x256xf32>, vector<12x256xf32> -> vector<12x256xf32>
    %c1_38 = arith.constant 1 : index
    %c0_39 = arith.constant 0 : index
    %c0_40 = arith.constant 0 : index
    %63 = vector.load %arg1[%c1_38, %c0_39, %c0_40] : memref<2x1x256xf32, #tpu.memory_space<vmem>>, vector<1x1x256xf32>
    %64 = vector.shape_cast %63 : vector<1x1x256xf32> to vector<1x256xf32>
    %cst_41 = arith.constant 5.000000e-01 : f32
    %65 = vector.broadcast %cst_41 : f32 to vector<1x256xf32>
    %66 = arith.addf %64, %65 : vector<1x256xf32>
    %67 = math.floor %66 : vector<1x256xf32>
    %68 = vector.broadcast %67 : vector<1x256xf32> to vector<12x256xf32>
    %69 = arith.mulf %62, %68 : vector<12x256xf32>
    %70 = arith.addf %43, %69 : vector<12x256xf32>
    %c1_42 = arith.constant 1 : index
    %c0_43 = arith.constant 0 : index
    %c0_44 = arith.constant 0 : index
    %71 = vector.load %arg5[%c1_42, %c0_43, %c0_44] : memref<2x12x256xf32, #tpu.memory_space<vmem>>, vector<1x12x256xf32>
    %72 = vector.shape_cast %71 : vector<1x12x256xf32> to vector<12x256xf32>
    %73 = vector.shape_cast %70 : vector<12x256xf32> to vector<1x12x256xf32>
    tpu.vector_store %arg5[%c1_42, %c0_43, %c0_44], %73 {strides = array<i32>} : memref<2x12x256xf32, #tpu.memory_space<vmem>>, vector<1x12x256xf32>,
    return
  }
}

</mosaic_0001>

<llo_original>
// kernel: _lambda_.1
$region0: #{_lambda_.1}
  #allocation0 [shape = 'u32[]', space=smem, size = 0x4, offset = 0x4, fixed_abs, tag = 'smem constant byte address 0x4 - core index']
  #allocation1 [shape = 'u32[144,128]{1,0:T(1,128)}', space=vmem, size = 0x12000, scoped, tag = 'internal scratch']
  %s0 = inlined_call_operand.vmem [shape: f32[2,12,256], index: 0, kind: input, shape index: {}]
  %s1 = inlined_call_operand.vmem [shape: f32[2,1,256], index: 1, kind: input, shape index: {}]
  %s2 = inlined_call_operand.vmem [shape: f32[96,108], index: 2, kind: input, shape index: {}]
  %s3 = inlined_call_operand.vmem [shape: f32[96,1], index: 3, kind: input, shape index: {}]
  %s4 = inlined_call_operand.vmem [shape: f32[12,96], index: 4, kind: input, shape index: {}]
  %s5 = inlined_call_operand.vmem [shape: f32[2,12,256], index: 5, kind: output, shape index: {}]
  %s6 = sld [smem:[#allocation0]]
  $region30: #{_lambda_.1} parent=0
    _
  %s8 = ssub.s32 1, %s6
  %s9 = scalar_select 0, %s8, %s6
  // Predicated region
  $region2: #{_lambda_.1} parent=0 // pred_check
    _
  $region3: #{_lambda_.1} parent=0 // pred_check_branch
    %11 = sbr.rel (0) target = $region5
  $region4: #{_lambda_.1} parent=0 // pred_region
    _
  $region5: #{_lambda_.1} parent=0 // pred_fallthru
    _
  // Predicated region
  $region6: #{_lambda_.1} parent=0 // pred_check
    _
  $region7: #{_lambda_.1} parent=0 // pred_check_branch
    %13 = sbr.rel (0) target = $region9
  $region8: #{_lambda_.1} parent=0 // pred_region
    _
  $region9: #{_lambda_.1} parent=0 // pred_fallthru
    _
  // Predicated region
  $region10: #{_lambda_.1} parent=0 // pred_check
    _
  $region11: #{_lambda_.1} parent=0 // pred_check_branch
    %15 = sbr.rel (0) target = $region13
  $region12: #{_lambda_.1} parent=0 // pred_region
    _
  $region13: #{_lambda_.1} parent=0 // pred_fallthru
    _
  // Predicated region
  $region14: #{_lambda_.1} parent=0 // pred_check
    _
  $region15: #{_lambda_.1} parent=0 // pred_check_branch
    %17 = sbr.rel (0) target = $region17
  $region16: #{_lambda_.1} parent=0 // pred_region
    _
  $region17: #{_lambda_.1} parent=0 // pred_fallthru
    _
  // Predicated region
  $region18: #{_lambda_.1} parent=0 // pred_check
    _
  $region19: #{_lambda_.1} parent=0 // pred_check_branch
    %19 = sbr.rel (0) target = $region21
  $region20: #{_lambda_.1} parent=0 // pred_region
    _
  $region21: #{_lambda_.1} parent=0 // pred_fallthru
    _
  %v20 = vld [vmem:[%s2] sm:$0xff]
  %v21 = vld [vmem:[%s2 + $0x8] sm:$0xff]
  %v22 = vld [vmem:[%s2 + $0x10] sm:$0xff]
  %v23 = vld [vmem:[%s2 + $0x18] sm:$0xff]
  %v24 = vld [vmem:[%s2 + $0x20] sm:$0xff]
  %v25 = vld [vmem:[%s2 + $0x28] sm:$0xff]
  %v26 = vld [vmem:[%s2 + $0x30] sm:$0xff]
  %v27 = vld [vmem:[%s2 + $0x38] sm:$0xff]
  %v28 = vld [vmem:[%s2 + $0x40] sm:$0xff]
  %v29 = vld [vmem:[%s2 + $0x48] sm:$0xff]
  %v30 = vld [vmem:[%s2 + $0x50] sm:$0xff]
  %v31 = vld [vmem:[%s2 + $0x58] sm:$0xff]
  %v32 = vld [vmem:[%s3] sm:$0xff]
  %v33 = vld [vmem:[%s3 + $0x8] sm:$0xff]
  %v34 = vld [vmem:[%s3 + $0x10] sm:$0xff]
  %v35 = vld [vmem:[%s3 + $0x18] sm:$0xff]
  %v36 = vld [vmem:[%s3 + $0x20] sm:$0xff]
  %v37 = vld [vmem:[%s3 + $0x28] sm:$0xff]
  %v38 = vld [vmem:[%s3 + $0x30] sm:$0xff]
  %v39 = vld [vmem:[%s3 + $0x38] sm:$0xff]
  %v40 = vld [vmem:[%s3 + $0x40] sm:$0xff]
  %v41 = vld [vmem:[%s3 + $0x48] sm:$0xff]
  %v42 = vld [vmem:[%s3 + $0x50] sm:$0xff]
  %v43 = vld [vmem:[%s3 + $0x58] sm:$0xff]
  %v44 = vld [vmem:[%s4] sm:$0xff]
  %v45 = vld [vmem:[%s4 + $0x8] sm:$0xf]
  %v46 = vlaneseq
  %v47 = vand.u32 %v46, 127
  %v48 = vadd.s32 %v47, 128
  %v49 = vand.u32 %v47, 15
  %v50 = vand.u32 %v48, 15
  %vm51 = vcmp.eq.s32.totalorder %v49, 0
  %vm52 = vcmp.eq.s32.totalorder %v50, 0
  %vm53 = vcmp.eq.s32.totalorder %v49, 15
  %vm54 = vcmp.eq.s32.totalorder %v50, 15
  %v55 = vld [vmem:[%s0] sm:$0xff]
  %v56 = vld [vmem:[%s0 + $0x8] sm:$0xff]
  %v57 = vld [vmem:[%s0 + $0x10] sm:$0xf]
  %v58 = vld [vmem:[%s0 + $0x18] sm:$0xf]
  %59 = vrot.lane.b32.xlu0 %v55, 113
  %v60 = vpop.permute.xlu0 %59
  %61 = vrot.lane.b32.xlu0 %v57, 113
  %v62 = vpop.permute.xlu0 %61
  %63 = vrot.lane.b32.xlu0 %v56, 113
  %v64 = vpop.permute.xlu0 %63
  %65 = vrot.lane.b32.xlu0 %v58, 113
  %v66 = vpop.permute.xlu0 %65
  %vm67 = vcmp.lt.s32.totalorder %v47, 113
  %v68 = vsel %vm67, %v60, %v64
  %v69 = vsel %vm67, %v62, %v66
  %v70 = vsel %vm67, %v64, %v60
  %v71 = vsel %vm67, %v66, %v62
  %72 = vrot.lane.b32.xlu0 %v55, 1
  %v73 = vpop.permute.xlu0 %72
  %74 = vrot.lane.b32.xlu0 %v57, 1
  %v75 = vpop.permute.xlu0 %74
  %76 = vrot.lane.b32.xlu0 %v56, 1
  %v77 = vpop.permute.xlu0 %76
  %78 = vrot.lane.b32.xlu0 %v58, 1
  %v79 = vpop.permute.xlu0 %78
  %vm80 = vcmp.lt.s32.totalorder %v47, 1
  %v81 = vsel %vm80, %v73, %v77
  %v82 = vsel %vm80, %v75, %v79
  %v83 = vsel %vm80, %v77, %v73
  %v84 = vsel %vm80, %v79, %v75
  %v85 = vsel %vm51, %v68, %v83
  %v86 = vsel %vm52, %v70, %v81
  %v87 = vsel %vm51, %v69, %v84
  %v88 = vsel %vm52, %v71, %v82
  %89 = vrot.lane.b32.xlu0 %v55, 15
  %v90 = vpop.permute.xlu0 %89
  %91 = vrot.lane.b32.xlu0 %v57, 15
  %v92 = vpop.permute.xlu0 %91
  %93 = vrot.lane.b32.xlu0 %v56, 15
  %v94 = vpop.permute.xlu0 %93
  %95 = vrot.lane.b32.xlu0 %v58, 15
  %v96 = vpop.permute.xlu0 %95
  %vm97 = vcmp.lt.s32.totalorder %v47, 15
  %v98 = vsel %vm97, %v90, %v94
  %v99 = vsel %vm97, %v92, %v96
  %v100 = vsel %vm97, %v94, %v90
  %v101 = vsel %vm97, %v96, %v92
  %102 = vrot.lane.b32.xlu0 %v55, 127
  %v103 = vpop.permute.xlu0 %102
  %104 = vrot.lane.b32.xlu0 %v57, 127
  %v105 = vpop.permute.xlu0 %104
  %106 = vrot.lane.b32.xlu0 %v56, 127
  %v107 = vpop.permute.xlu0 %106
  %108 = vrot.lane.b32.xlu0 %v58, 127
  %v109 = vpop.permute.xlu0 %108
  %vm110 = vcmp.lt.s32.totalorder %v47, 127
  %v111 = vsel %vm110, %v103, %v107
  %v112 = vsel %vm110, %v105, %v109
  %v113 = vsel %vm110, %v107, %v103
  %v114 = vsel %vm110, %v109, %v105
  %v115 = vsel %vm53, %v100, %v111
  %v116 = vsel %vm54, %v98, %v113
  %v117 = vsel %vm53, %v101, %v112
  %v118 = vsel %vm54, %v99, %v114
  %119 = vrot.lane.b32.xlu0 %v85, 16
  %v120 = vpop.permute.xlu0 %119
  %121 = vrot.lane.b32.xlu0 %v87, 16
  %v122 = vpop.permute.xlu0 %121
  %123 = vrot.lane.b32.xlu0 %v86, 16
  %v124 = vpop.permute.xlu0 %123
  %125 = vrot.lane.b32.xlu0 %v88, 16
  %v126 = vpop.permute.xlu0 %125
  %vm127 = vcmp.lt.s32.totalorder %v47, 16
  %v128 = vsel %vm127, %v120, %v124
  %v129 = vsel %vm127, %v122, %v126
  %v130 = vsel %vm127, %v124, %v120
  %v131 = vsel %vm127, %v126, %v122
  %132 = vrot.lane.b32.xlu0 %v55, 16
  %v133 = vpop.permute.xlu0 %132
  %134 = vrot.lane.b32.xlu0 %v57, 16
  %v135 = vpop.permute.xlu0 %134
  %136 = vrot.lane.b32.xlu0 %v56, 16
  %v137 = vpop.permute.xlu0 %136
  %138 = vrot.lane.b32.xlu0 %v58, 16
  %v139 = vpop.permute.xlu0 %138
  %v140 = vsel %vm127, %v133, %v137
  %v141 = vsel %vm127, %v135, %v139
  %v142 = vsel %vm127, %v137, %v133
  %v143 = vsel %vm127, %v139, %v135
  %144 = vrot.lane.b32.xlu0 %v115, 16
  %v145 = vpop.permute.xlu0 %144
  %146 = vrot.lane.b32.xlu0 %v117, 16
  %v147 = vpop.permute.xlu0 %146
  %148 = vrot.lane.b32.xlu0 %v116, 16
  %v149 = vpop.permute.xlu0 %148
  %150 = vrot.lane.b32.xlu0 %v118, 16
  %v151 = vpop.permute.xlu0 %150
  %v152 = vsel %vm127, %v145, %v149
  %v153 = vsel %vm127, %v147, %v151
  %v154 = vsel %vm127, %v149, %v145
  %v155 = vsel %vm127, %v151, %v147
  %156 = vrot.lane.b32.xlu0 %v85, 112
  %v157 = vpop.permute.xlu0 %156
  %158 = vrot.lane.b32.xlu0 %v87, 112
  %v159 = vpop.permute.xlu0 %158
  %160 = vrot.lane.b32.xlu0 %v86, 112
  %v161 = vpop.permute.xlu0 %160
  %162 = vrot.lane.b32.xlu0 %v88, 112
  %v163 = vpop.permute.xlu0 %162
  %vm164 = vcmp.lt.s32.totalorder %v47, 112
  %v165 = vsel %vm164, %v157, %v161
  %v166 = vsel %vm164, %v159, %v163
  %v167 = vsel %vm164, %v161, %v157
  %v168 = vsel %vm164, %v163, %v159
  %169 = vrot.lane.b32.xlu0 %v55, 112
  %v170 = vpop.permute.xlu0 %169
  %171 = vrot.lane.b32.xlu0 %v57, 112
  %v172 = vpop.permute.xlu0 %171
  %173 = vrot.lane.b32.xlu0 %v56, 112
  %v174 = vpop.permute.xlu0 %173
  %175 = vrot.lane.b32.xlu0 %v58, 112
  %v176 = vpop.permute.xlu0 %175
  %v177 = vsel %vm164, %v170, %v174
  %v178 = vsel %vm164, %v172, %v176
  %v179 = vsel %vm164, %v174, %v170
  %v180 = vsel %vm164, %v176, %v172
  %181 = vrot.lane.b32.xlu0 %v115, 112
  %v182 = vpop.permute.xlu0 %181
  %183 = vrot.lane.b32.xlu0 %v117, 112
  %v184 = vpop.permute.xlu0 %183
  %185 = vrot.lane.b32.xlu0 %v116, 112
  %v186 = vpop.permute.xlu0 %185
  %187 = vrot.lane.b32.xlu0 %v118, 112
  %v188 = vpop.permute.xlu0 %187
  %v189 = vsel %vm164, %v182, %v186
  %v190 = vsel %vm164, %v184, %v188
  %v191 = vsel %vm164, %v186, %v182
  %v192 = vsel %vm164, %v188, %v184
  %vm197 = vcmask 1043456
  %v198 = vrot.slane %v142, 4
  %v199 = vrot.slane %v140, 4
  %v200 = vrot.slane %v143, 4
  %v201 = vsel %vm197, %v198, %v200
  %v202 = vrot.slane %v141, 4
  %v203 = vsel %vm197, %v199, %v202
  %v212 = vrot.slane %v85, 4
  %v213 = vrot.slane %v86, 4
  %v214 = vrot.slane %v87, 4
  %v215 = vsel %vm197, %v212, %v214
  %v216 = vrot.slane %v88, 4
  %v217 = vsel %vm197, %v213, %v216
  %v226 = vrot.slane %v115, 4
  %v227 = vrot.slane %v116, 4
  %v228 = vrot.slane %v117, 4
  %v229 = vsel %vm197, %v226, %v228
  %v230 = vrot.slane %v118, 4
  %v231 = vsel %vm197, %v227, %v230
  %v240 = vrot.slane %v177, 4
  %v241 = vrot.slane %v179, 4
  %v242 = vrot.slane %v178, 4
  %v243 = vsel %vm197, %v240, %v242
  %v244 = vrot.slane %v180, 4
  %v245 = vsel %vm197, %v241, %v244
  %v250 = vsel %vm197, %v131, %v198
  %v251 = vsel %vm197, %v129, %v199
  %v252 = vsel %vm197, %v155, %v212
  %v253 = vsel %vm197, %v153, %v213
  %v254 = vsel %vm197, %v57, %v226
  %v255 = vsel %vm197, %v58, %v227
  %v256 = vsel %vm197, %v166, %v240
  %v257 = vsel %vm197, %v168, %v241
  %259 = vset.pattern.permute.xlu0 0
  %260 = vperm.xlu0 %259, %v32
  %v261 = vpop.permute.xlu0 %260
  %264 = vset.pattern.permute.xlu0 0
  %265 = vperm.xlu0 %264, %v33
  %v266 = vpop.permute.xlu0 %265
  %269 = vset.pattern.permute.xlu0 0
  %270 = vperm.xlu0 %269, %v34
  %v271 = vpop.permute.xlu0 %270
  %274 = vset.pattern.permute.xlu0 0
  %275 = vperm.xlu0 %274, %v35
  %v276 = vpop.permute.xlu0 %275
  %279 = vset.pattern.permute.xlu0 0
  %280 = vperm.xlu0 %279, %v36
  %v281 = vpop.permute.xlu0 %280
  %284 = vset.pattern.permute.xlu0 0
  %285 = vperm.xlu0 %284, %v37
  %v286 = vpop.permute.xlu0 %285
  %289 = vset.pattern.permute.xlu0 0
  %290 = vperm.xlu0 %289, %v38
  %v291 = vpop.permute.xlu0 %290
  %294 = vset.pattern.permute.xlu0 0
  %295 = vperm.xlu0 %294, %v39
  %v296 = vpop.permute.xlu0 %295
  %299 = vset.pattern.permute.xlu0 0
  %300 = vperm.xlu0 %299, %v40
  %v301 = vpop.permute.xlu0 %300
  %304 = vset.pattern.permute.xlu0 0
  %305 = vperm.xlu0 %304, %v41
  %v306 = vpop.permute.xlu0 %305
  %309 = vset.pattern.permute.xlu0 0
  %310 = vperm.xlu0 %309, %v42
  %v311 = vpop.permute.xlu0 %310
  %314 = vset.pattern.permute.xlu0 0
  %315 = vperm.xlu0 %314, %v43
  %v316 = vpop.permute.xlu0 %315
  %vm318 = vcmask 883712
  %v320 = vsel %vm318, %v20, 0
  %v323 = vsel %vm318, %v21, 0
  %v326 = vsel %vm318, %v22, 0
  %v329 = vsel %vm318, %v23, 0
  %v332 = vsel %vm318, %v24, 0
  %v335 = vsel %vm318, %v25, 0
  %v338 = vsel %vm318, %v26, 0
  %v341 = vsel %vm318, %v27, 0
  %v344 = vsel %vm318, %v28, 0
  %v347 = vsel %vm318, %v29, 0
  %v350 = vsel %vm318, %v30, 0
  %v353 = vsel %vm318, %v31, 0
  %v356 = vsel %vm197, %v190, 0
  %v359 = vsel %vm197, %v192, 0
  %361 = vmatprep.subr.mxu0 %v128
  %362 = vmatpush1.msra.mxu0 %v130
  %363 = vmatprep.subr.mxu0 %v251
  %364 = vmatpush1.msra.mxu0 %v250
  %365 = vmatprep.subr.mxu0 %v203
  %366 = vmatpush1.msra.mxu0 %v201
  %367 = vmatprep.subr.mxu0 %v152
  %368 = vmatpush1.msra.mxu0 %v154
  %369 = vmatprep.subr.mxu0 %v253
  %370 = vmatpush1.msra.mxu0 %v252
  %371 = vmatprep.subr.mxu0 %v217
  %372 = vmatpush1.msra.mxu0 %v215
  %373 = vmatprep.subr.mxu0 %v56
  %374 = vmatpush1.msra.mxu0 %v55
  %375 = vmatprep.subr.mxu0 %v255
  %376 = vmatpush1.msra.mxu0 %v254
  %377 = vmatprep.subr.mxu0 %v231
  %378 = vmatpush1.msra.mxu0 %v229
  %379 = vmatprep.subr.mxu0 %v167
  %380 = vmatpush1.msra.mxu0 %v165
  %381 = vmatprep.subr.mxu0 %v257
  %382 = vmatpush1.msra.mxu0 %v256
  %383 = vmatprep.subr.mxu0 %v245
  %384 = vmatpush1.msra.mxu0 %v243
  %385 = vmatprep.subr.mxu0 %v191
  %386 = vmatpush1.msra.mxu0 %v189
  %387 = vmatprep.subr.mxu0 %v359
  %388 = vmatpush1.msra.mxu0 %v356
  %389 = vmatprep.subr.mxu0 0.0
  %390 = vmatpush1.msra.mxu0 0.0
  %391 = vmatprep.subr.mxu0 0.0
  %392 = vmatpush1.msra.mxu0 0.0
  %393 = vmatprep.subr.mxu0 0.0
  %394 = vmatpush1.msra.mxu0 0.0
  %395 = vmatprep.subr.mxu0 0.0
  %396 = vmatpush1.msra.mxu0 0.0
  %397 = vmatprep.subr.mxu0 0.0
  %398 = vmatpush1.msra.mxu0 0.0
  %399 = vmatprep.subr.mxu0 0.0
  %400 = vmatpush1.msra.mxu0 0.0
  %401 = vmatprep.subr.mxu0 0.0
  %402 = vmatpush1.msra.mxu0 0.0
  %403 = vmatprep.subr.mxu0 0.0
  %404 = vmatpush1.msra.mxu0 0.0
  %405 = vmatprep.subr.mxu0 0.0
  %406 = vmatpush1.msra.mxu0 0.0
  %407 = vmatprep.subr.mxu0 0.0
  %408 = vmatpush1.msra.mxu0 0.0
  %409 = vmatprep.subr.mxu0 0.0
  %410 = vmatpush1.msra.mxu0 0.0
  %411 = vmatprep.subr.mxu0 0.0
  %412 = vmatpush1.msra.mxu0 0.0
  %413 = vmatprep.subr.mxu0 0.0
  %414 = vmatpush1.msra.mxu0 0.0
  %415 = vmatprep.subr.mxu0 0.0
  %416 = vmatpush1.msra.mxu0 0.0
  %417 = vmatprep.subr.mxu0 0.0
  %418 = vmatpush1.msra.mxu0 0.0
  %419 = vmatprep.subr.mxu0 0.0
  %420 = vmatpush1.msra.mxu0 0.0
  %421 = vmatprep.subr.mxu0 0.0
  %422 = vmatpush1.msra.mxu0 0.0
  %423 = vmatprep.subr.mxu0 0.0
  %424 = vmatpush1.msra.mxu0 0.0
  %425 = vmatprep.mubr.f32.mxu0 0.0
  %426 = vmatmul.mubr.f32.gmra.mrb[0].mxu0 %v320
  %v427 = vpop.f32.mrb[0].mxu0
  %v428 = vadd.f32 %v261, %v427
  %v429 = vpop.f32.mrb[0].mxu0
  %v430 = vadd.f32 %v261, %v429
  %431 = vmatprep.mubr.f32.mxu0 0.0
  %432 = vmatmul.mubr.f32.gmra.mrb[0].mxu0 %v323
  %v433 = vpop.f32.mrb[0].mxu0
  %v434 = vadd.f32 %v266, %v433
  %v435 = vpop.f32.mrb[0].mxu0
  %v436 = vadd.f32 %v266, %v435
  %437 = vmatprep.mubr.f32.mxu0 0.0
  %438 = vmatmul.mubr.f32.gmra.mrb[0].mxu0 %v326
  %v439 = vpop.f32.mrb[0].mxu0
  %v440 = vadd.f32 %v271, %v439
  %v441 = vpop.f32.mrb[0].mxu0
  %v442 = vadd.f32 %v271, %v441
  %443 = vmatprep.mubr.f32.mxu0 0.0
  %444 = vmatmul.mubr.f32.gmra.mrb[0].mxu0 %v329
  %v445 = vpop.f32.mrb[0].mxu0
  %v446 = vadd.f32 %v276, %v445
  %v447 = vpop.f32.mrb[0].mxu0
  %v448 = vadd.f32 %v276, %v447
  %449 = vmatprep.mubr.f32.mxu0 0.0
  %450 = vmatmul.mubr.f32.gmra.mrb[0].mxu0 %v332
  %v451 = vpop.f32.mrb[0].mxu0
  %v452 = vadd.f32 %v281, %v451
  %v453 = vpop.f32.mrb[0].mxu0
  %v454 = vadd.f32 %v281, %v453
  %455 = vmatprep.mubr.f32.mxu0 0.0
  %456 = vmatmul.mubr.f32.gmra.mrb[0].mxu0 %v335
  %v457 = vpop.f32.mrb[0].mxu0
  %v458 = vadd.f32 %v286, %v457
  %v459 = vpop.f32.mrb[0].mxu0
  %v460 = vadd.f32 %v286, %v459
  %461 = vmatprep.mubr.f32.mxu0 0.0
  %462 = vmatmul.mubr.f32.gmra.mrb[0].mxu0 %v338
  %v463 = vpop.f32.mrb[0].mxu0
  %v464 = vadd.f32 %v291, %v463
  %v465 = vpop.f32.mrb[0].mxu0
  %v466 = vadd.f32 %v291, %v465
  %467 = vmatprep.mubr.f32.mxu0 0.0
  %468 = vmatmul.mubr.f32.gmra.mrb[0].mxu0 %v341
  %v469 = vpop.f32.mrb[0].mxu0
  %v470 = vadd.f32 %v296, %v469
  %v471 = vpop.f32.mrb[0].mxu0
  %v472 = vadd.f32 %v296, %v471
  %473 = vmatprep.mubr.f32.mxu0 0.0
  %474 = vmatmul.mubr.f32.gmra.mrb[0].mxu0 %v344
  %v475 = vpop.f32.mrb[0].mxu0
  %v476 = vadd.f32 %v301, %v475
  %v477 = vpop.f32.mrb[0].mxu0
  %v478 = vadd.f32 %v301, %v477
  %479 = vmatprep.mubr.f32.mxu0 0.0
  %480 = vmatmul.mubr.f32.gmra.mrb[0].mxu0 %v347
  %v481 = vpop.f32.mrb[0].mxu0
  %v482 = vadd.f32 %v306, %v481
  %v483 = vpop.f32.mrb[0].mxu0
  %v484 = vadd.f32 %v306, %v483
  %485 = vmatprep.mubr.f32.mxu0 0.0
  %486 = vmatmul.mubr.f32.gmra.mrb[0].mxu0 %v350
  %v487 = vpop.f32.mrb[0].mxu0
  %v488 = vadd.f32 %v311, %v487
  %v489 = vpop.f32.mrb[0].mxu0
  %v490 = vadd.f32 %v311, %v489
  %491 = vmatprep.mubr.f32.mxu0 0.0
  %492 = vmatmul.mubr.f32.gmra.mrb[0].mxu0 %v353
  %v493 = vpop.f32.mrb[0].mxu0
  %v494 = vadd.f32 %v316, %v493
  %v495 = vpop.f32.mrb[0].mxu0
  %v496 = vadd.f32 %v316, %v495
  %497 = vdwg.mxu0
  %v498 = vmax.f32 %v428, 0.0
  %v499 = vmax.f32 %v430, 0.0
  %v500 = vmax.f32 %v434, 0.0
  %v501 = vmax.f32 %v436, 0.0
  %v502 = vmax.f32 %v440, 0.0
  %v503 = vmax.f32 %v442, 0.0
  %v504 = vmax.f32 %v446, 0.0
  %v505 = vmax.f32 %v448, 0.0
  %v506 = vmax.f32 %v452, 0.0
  %v507 = vmax.f32 %v454, 0.0
  %v508 = vmax.f32 %v458, 0.0
  %v509 = vmax.f32 %v460, 0.0
  %v510 = vmax.f32 %v464, 0.0
  %v511 = vmax.f32 %v466, 0.0
  %v512 = vmax.f32 %v470, 0.0
  %v513 = vmax.f32 %v472, 0.0
  %v514 = vmax.f32 %v476, 0.0
  %v515 = vmax.f32 %v478, 0.0
  %v516 = vmax.f32 %v482, 0.0
  %v517 = vmax.f32 %v484, 0.0
  %v518 = vmax.f32 %v488, 0.0
  %v519 = vmax.f32 %v490, 0.0
  %v520 = vmax.f32 %v494, 0.0
  %v521 = vmax.f32 %v496, 0.0
  %vm522 = vcmask 785408
  %v524 = vsel %vm522, %v44, 0
  %v527 = vsel %vm522, %v45, 0
  %529 = vmatprep.subr.mxu0 %v499
  %530 = vmatpush1.msra.mxu0 %v498
  %531 = vmatprep.subr.mxu0 %v501
  %532 = vmatpush1.msra.mxu0 %v500
  %533 = vmatprep.subr.mxu0 %v503
  %534 = vmatpush1.msra.mxu0 %v502
  %535 = vmatprep.subr.mxu0 %v505
  %536 = vmatpush1.msra.mxu0 %v504
  %537 = vmatprep.subr.mxu0 %v507
  %538 = vmatpush1.msra.mxu0 %v506
  %539 = vmatprep.subr.mxu0 %v509
  %540 = vmatpush1.msra.mxu0 %v508
  %541 = vmatprep.subr.mxu0 %v511
  %542 = vmatpush1.msra.mxu0 %v510
  %543 = vmatprep.subr.mxu0 %v513
  %544 = vmatpush1.msra.mxu0 %v512
  %545 = vmatprep.subr.mxu0 %v515
  %546 = vmatpush1.msra.mxu0 %v514
  %547 = vmatprep.subr.mxu0 %v517
  %548 = vmatpush1.msra.mxu0 %v516
  %549 = vmatprep.subr.mxu0 %v519
  %550 = vmatpush1.msra.mxu0 %v518
  %551 = vmatprep.subr.mxu0 %v521
  %552 = vmatpush1.msra.mxu0 %v520
  %553 = vmatprep.subr.mxu0 0.0
  %554 = vmatpush1.msra.mxu0 0.0
  %555 = vmatprep.subr.mxu0 0.0
  %556 = vmatpush1.msra.mxu0 0.0
  %557 = vmatprep.subr.mxu0 0.0
  %558 = vmatpush1.msra.mxu0 0.0
  %559 = vmatprep.subr.mxu0 0.0
  %560 = vmatpush1.msra.mxu0 0.0
  %561 = vmatprep.subr.mxu0 0.0
  %562 = vmatpush1.msra.mxu0 0.0
  %563 = vmatprep.subr.mxu0 0.0
  %564 = vmatpush1.msra.mxu0 0.0
  %565 = vmatprep.subr.mxu0 0.0
  %566 = vmatpush1.msra.mxu0 0.0
  %567 = vmatprep.subr.mxu0 0.0
  %568 = vmatpush1.msra.mxu0 0.0
  %569 = vmatprep.subr.mxu0 0.0
  %570 = vmatpush1.msra.mxu0 0.0
  %571 = vmatprep.subr.mxu0 0.0
  %572 = vmatpush1.msra.mxu0 0.0
  %573 = vmatprep.subr.mxu0 0.0
  %574 = vmatpush1.msra.mxu0 0.0
  %575 = vmatprep.subr.mxu0 0.0
  %576 = vmatpush1.msra.mxu0 0.0
  %577 = vmatprep.subr.mxu0 0.0
  %578 = vmatpush1.msra.mxu0 0.0
  %579 = vmatprep.subr.mxu0 0.0
  %580 = vmatpush1.msra.mxu0 0.0
  %581 = vmatprep.subr.mxu0 0.0
  %582 = vmatpush1.msra.mxu0 0.0
  %583 = vmatprep.subr.mxu0 0.0
  %584 = vmatpush1.msra.mxu0 0.0
  %585 = vmatprep.subr.mxu0 0.0
  %586 = vmatpush1.msra.mxu0 0.0
  %587 = vmatprep.subr.mxu0 0.0
  %588 = vmatpush1.msra.mxu0 0.0
  %589 = vmatprep.subr.mxu0 0.0
  %590 = vmatpush1.msra.mxu0 0.0
  %591 = vmatprep.subr.mxu0 0.0
  %592 = vmatpush1.msra.mxu0 0.0
  %593 = vmatprep.mubr.f32.mxu0 0.0
  %594 = vmatmul.mubr.f32.gmra.mrb[0].mxu0 %v524
  %v595 = vpop.f32.mrb[0].mxu0
  %v596 = vadd.f32 0.0, %v595
  %v597 = vpop.f32.mrb[0].mxu0
  %v598 = vadd.f32 0.0, %v597
  %599 = vmatprep.mubr.f32.mxu0 0.0
  %600 = vmatmul.mubr.f32.gmra.mrb[0].mxu0 %v527
  %v601 = vpop.f32.mrb[0].mxu0
  %v602 = vadd.f32 0.0, %v601
  %v603 = vpop.f32.mrb[0].mxu0
  %v604 = vadd.f32 0.0, %v603
  %605 = vdwg.mxu0
  %v606 = vld [vmem:[%s1] sm:$0x3]
  %v607 = vadd.f32 %v606, 0.5
  %v608 = vfloor.f32 %v607
  %v610 = vlaneseq
  %v611 = vshrl.u32 %v610, 7
  %v612 = vsub.s32 0, %v611
  %v613 = vrot.slane %v608, %v612
  %v614 = vlaneseq
  %v615 = vshrl.u32 %v614, 7
  %v616 = vsub.s32 1, %v615
  %v617 = vrot.slane %v608, %v616
  %v620 = vmul.f32 %v596, %v613
  %v621 = vmul.f32 %v598, %v617
  %v622 = vmul.f32 %v602, %v613
  %v623 = vmul.f32 %v604, %v617
  %v624 = vadd.f32 %v55, %v620
  %v625 = vadd.f32 %v56, %v621
  %v626 = vadd.f32 %v57, %v622
  %v627 = vadd.f32 %v58, %v623
  %628 = vst [vmem:[%s5] sm:$0xff] %v624
  %629 = vst [vmem:[%s5 + $0x8] sm:$0xff] %v625
  %630 = vst [vmem:[%s5 + $0x10] sm:$0xf] %v626
  %631 = vst [vmem:[%s5 + $0x18] sm:$0xf] %v627
  %s632 = scalar_lea.vmem %s0, 32
  %v633 = vld [vmem:[%s632] sm:$0xff]
  %v634 = vld [vmem:[%s632 + $0x8] sm:$0xff]
  %v635 = vld [vmem:[%s632 + $0x10] sm:$0xf]
  %v636 = vld [vmem:[%s632 + $0x18] sm:$0xf]
  %637 = vrot.lane.b32.xlu0 %v633, 113
  %v638 = vpop.permute.xlu0 %637
  %639 = vrot.lane.b32.xlu0 %v635, 113
  %v640 = vpop.permute.xlu0 %639
  %641 = vrot.lane.b32.xlu0 %v634, 113
  %v642 = vpop.permute.xlu0 %641
  %643 = vrot.lane.b32.xlu0 %v636, 113
  %v644 = vpop.permute.xlu0 %643
  %v645 = vsel %vm67, %v638, %v642
  %v646 = vsel %vm67, %v640, %v644
  %v647 = vsel %vm67, %v642, %v638
  %v648 = vsel %vm67, %v644, %v640
  %649 = vrot.lane.b32.xlu0 %v633, 1
  %v650 = vpop.permute.xlu0 %649
  %651 = vrot.lane.b32.xlu0 %v635, 1
  %v652 = vpop.permute.xlu0 %651
  %653 = vrot.lane.b32.xlu0 %v634, 1
  %v654 = vpop.permute.xlu0 %653
  %655 = vrot.lane.b32.xlu0 %v636, 1
  %v656 = vpop.permute.xlu0 %655
  %v657 = vsel %vm80, %v650, %v654
  %v658 = vsel %vm80, %v652, %v656
  %v659 = vsel %vm80, %v654, %v650
  %v660 = vsel %vm80, %v656, %v652
  %v661 = vsel %vm51, %v645, %v659
  %v662 = vsel %vm52, %v647, %v657
  %v663 = vsel %vm51, %v646, %v660
  %v664 = vsel %vm52, %v648, %v658
  %665 = vrot.lane.b32.xlu0 %v633, 15
  %v666 = vpop.permute.xlu0 %665
  %667 = vrot.lane.b32.xlu0 %v635, 15
  %v668 = vpop.permute.xlu0 %667
  %669 = vrot.lane.b32.xlu0 %v634, 15
  %v670 = vpop.permute.xlu0 %669
  %671 = vrot.lane.b32.xlu0 %v636, 15
  %v672 = vpop.permute.xlu0 %671
  %v673 = vsel %vm97, %v666, %v670
  %v674 = vsel %vm97, %v668, %v672
  %v675 = vsel %vm97, %v670, %v666
  %v676 = vsel %vm97, %v672, %v668
  %677 = vrot.lane.b32.xlu0 %v633, 127
  %v678 = vpop.permute.xlu0 %677
  %679 = vrot.lane.b32.xlu0 %v635, 127
  %v680 = vpop.permute.xlu0 %679
  %681 = vrot.lane.b32.xlu0 %v634, 127
  %v682 = vpop.permute.xlu0 %681
  %683 = vrot.lane.b32.xlu0 %v636, 127
  %v684 = vpop.permute.xlu0 %683
  %v685 = vsel %vm110, %v678, %v682
  %v686 = vsel %vm110, %v680, %v684
  %v687 = vsel %vm110, %v682, %v678
  %v688 = vsel %vm110, %v684, %v680
  %v689 = vsel %vm53, %v675, %v685
  %v690 = vsel %vm54, %v673, %v687
  %v691 = vsel %vm53, %v676, %v686
  %v692 = vsel %vm54, %v674, %v688
  %693 = vrot.lane.b32.xlu0 %v661, 16
  %v694 = vpop.permute.xlu0 %693
  %695 = vrot.lane.b32.xlu0 %v663, 16
  %v696 = vpop.permute.xlu0 %695
  %697 = vrot.lane.b32.xlu0 %v662, 16
  %v698 = vpop.permute.xlu0 %697
  %699 = vrot.lane.b32.xlu0 %v664, 16
  %v700 = vpop.permute.xlu0 %699
  %v701 = vsel %vm127, %v694, %v698
  %v702 = vsel %vm127, %v696, %v700
  %v703 = vsel %vm127, %v698, %v694
  %v704 = vsel %vm127, %v700, %v696
  %705 = vrot.lane.b32.xlu0 %v633, 16
  %v706 = vpop.permute.xlu0 %705
  %707 = vrot.lane.b32.xlu0 %v635, 16
  %v708 = vpop.permute.xlu0 %707
  %709 = vrot.lane.b32.xlu0 %v634, 16
  %v710 = vpop.permute.xlu0 %709
  %711 = vrot.lane.b32.xlu0 %v636, 16
  %v712 = vpop.permute.xlu0 %711
  %v713 = vsel %vm127, %v706, %v710
  %v714 = vsel %vm127, %v708, %v712
  %v715 = vsel %vm127, %v710, %v706
  %v716 = vsel %vm127, %v712, %v708
  %717 = vrot.lane.b32.xlu0 %v689, 16
  %v718 = vpop.permute.xlu0 %717
  %719 = vrot.lane.b32.xlu0 %v691, 16
  %v720 = vpop.permute.xlu0 %719
  %721 = vrot.lane.b32.xlu0 %v690, 16
  %v722 = vpop.permute.xlu0 %721
  %723 = vrot.lane.b32.xlu0 %v692, 16
  %v724 = vpop.permute.xlu0 %723
  %v725 = vsel %vm127, %v718, %v722
  %v726 = vsel %vm127, %v720, %v724
  %v727 = vsel %vm127, %v722, %v718
  %v728 = vsel %vm127, %v724, %v720
  %729 = vrot.lane.b32.xlu0 %v661, 112
  %v730 = vpop.permute.xlu0 %729
  %731 = vrot.lane.b32.xlu0 %v663, 112
  %v732 = vpop.permute.xlu0 %731
  %733 = vrot.lane.b32.xlu0 %v662, 112
  %v734 = vpop.permute.xlu0 %733
  %735 = vrot.lane.b32.xlu0 %v664, 112
  %v736 = vpop.permute.xlu0 %735
  %v737 = vsel %vm164, %v730, %v734
  %v738 = vsel %vm164, %v732, %v736
  %v739 = vsel %vm164, %v734, %v730
  %v740 = vsel %vm164, %v736, %v732
  %741 = vrot.lane.b32.xlu0 %v633, 112
  %v742 = vpop.permute.xlu0 %741
  %743 = vrot.lane.b32.xlu0 %v635, 112
  %v744 = vpop.permute.xlu0 %743
  %745 = vrot.lane.b32.xlu0 %v634, 112
  %v746 = vpop.permute.xlu0 %745
  %747 = vrot.lane.b32.xlu0 %v636, 112
  %v748 = vpop.permute.xlu0 %747
  %v749 = vsel %vm164, %v742, %v746
  %v750 = vsel %vm164, %v744, %v748
  %v751 = vsel %vm164, %v746, %v742
  %v752 = vsel %vm164, %v748, %v744
  %753 = vrot.lane.b32.xlu0 %v689, 112
  %v754 = vpop.permute.xlu0 %753
  %755 = vrot.lane.b32.xlu0 %v691, 112
  %v756 = vpop.permute.xlu0 %755
  %757 = vrot.lane.b32.xlu0 %v690, 112
  %v758 = vpop.permute.xlu0 %757
  %759 = vrot.lane.b32.xlu0 %v692, 112
  %v760 = vpop.permute.xlu0 %759
  %v761 = vsel %vm164, %v754, %v758
  %v762 = vsel %vm164, %v756, %v760
  %v763 = vsel %vm164, %v758, %v754
  %v764 = vsel %vm164, %v760, %v756
  %v769 = vrot.slane %v715, 4
  %v770 = vrot.slane %v713, 4
  %v771 = vrot.slane %v716, 4
  %v772 = vsel %vm197, %v769, %v771
  %v773 = vrot.slane %v714, 4
  %v774 = vsel %vm197, %v770, %v773
  %v783 = vrot.slane %v661, 4
  %v784 = vrot.slane %v662, 4
  %v785 = vrot.slane %v663, 4
  %v786 = vsel %vm197, %v783, %v785
  %v787 = vrot.slane %v664, 4
  %v788 = vsel %vm197, %v784, %v787
  %v797 = vrot.slane %v689, 4
  %v798 = vrot.slane %v690, 4
  %v799 = vrot.slane %v691, 4
  %v800 = vsel %vm197, %v797, %v799
  %v801 = vrot.slane %v692, 4
  %v802 = vsel %vm197, %v798, %v801
  %v811 = vrot.slane %v749, 4
  %v812 = vrot.slane %v751, 4
  %v813 = vrot.slane %v750, 4
  %v814 = vsel %vm197, %v811, %v813
  %v815 = vrot.slane %v752, 4
  %v816 = vsel %vm197, %v812, %v815
  %v821 = vsel %vm197, %v704, %v769
  %v822 = vsel %vm197, %v702, %v770
  %v823 = vsel %vm197, %v728, %v783
  %v824 = vsel %vm197, %v726, %v784
  %v825 = vsel %vm197, %v635, %v797
  %v826 = vsel %vm197, %v636, %v798
  %v827 = vsel %vm197, %v738, %v811
  %v828 = vsel %vm197, %v740, %v812
  %v830 = vsel %vm197, %v762, 0
  %v833 = vsel %vm197, %v764, 0
  %835 = vmatprep.subr.mxu0 %v701
  %836 = vmatpush1.msra.mxu0 %v703
  %837 = vmatprep.subr.mxu0 %v822
  %838 = vmatpush1.msra.mxu0 %v821
  %839 = vmatprep.subr.mxu0 %v774
  %840 = vmatpush1.msra.mxu0 %v772
  %841 = vmatprep.subr.mxu0 %v725
  %842 = vmatpush1.msra.mxu0 %v727
  %843 = vmatprep.subr.mxu0 %v824
  %844 = vmatpush1.msra.mxu0 %v823
  %845 = vmatprep.subr.mxu0 %v788
  %846 = vmatpush1.msra.mxu0 %v786
  %847 = vmatprep.subr.mxu0 %v634
  %848 = vmatpush1.msra.mxu0 %v633
  %849 = vmatprep.subr.mxu0 %v826
  %850 = vmatpush1.msra.mxu0 %v825
  %851 = vmatprep.subr.mxu0 %v802
  %852 = vmatpush1.msra.mxu0 %v800
  %853 = vmatprep.subr.mxu0 %v739
  %854 = vmatpush1.msra.mxu0 %v737
  %855 = vmatprep.subr.mxu0 %v828
  %856 = vmatpush1.msra.mxu0 %v827
  %857 = vmatprep.subr.mxu0 %v816
  %858 = vmatpush1.msra.mxu0 %v814
  %859 = vmatprep.subr.mxu0 %v763
  %860 = vmatpush1.msra.mxu0 %v761
  %861 = vmatprep.subr.mxu0 %v833
  %862 = vmatpush1.msra.mxu0 %v830
  %863 = vmatprep.subr.mxu0 0.0
  %864 = vmatpush1.msra.mxu0 0.0
  %865 = vmatprep.subr.mxu0 0.0
  %866 = vmatpush1.msra.mxu0 0.0
  %867 = vmatprep.subr.mxu0 0.0
  %868 = vmatpush1.msra.mxu0 0.0
  %869 = vmatprep.subr.mxu0 0.0
  %870 = vmatpush1.msra.mxu0 0.0
  %871 = vmatprep.subr.mxu0 0.0
  %872 = vmatpush1.msra.mxu0 0.0
  %873 = vmatprep.subr.mxu0 0.0
  %874 = vmatpush1.msra.mxu0 0.0
  %875 = vmatprep.subr.mxu0 0.0
  %876 = vmatpush1.msra.mxu0 0.0
  %877 = vmatprep.subr.mxu0 0.0
  %878 = vmatpush1.msra.mxu0 0.0
  %879 = vmatprep.subr.mxu0 0.0
  %880 = vmatpush1.msra.mxu0 0.0
  %881 = vmatprep.subr.mxu0 0.0
  %882 = vmatpush1.msra.mxu0 0.0
  %883 = vmatprep.subr.mxu0 0.0
  %884 = vmatpush1.msra.mxu0 0.0
  %885 = vmatprep.subr.mxu0 0.0
  %886 = vmatpush1.msra.mxu0 0.0
  %887 = vmatprep.subr.mxu0 0.0
  %888 = vmatpush1.msra.mxu0 0.0
  %889 = vmatprep.subr.mxu0 0.0
  %890 = vmatpush1.msra.mxu0 0.0
  %891 = vmatprep.subr.mxu0 0.0
  %892 = vmatpush1.msra.mxu0 0.0
  %893 = vmatprep.subr.mxu0 0.0
  %894 = vmatpush1.msra.mxu0 0.0
  %895 = vmatprep.subr.mxu0 0.0
  %896 = vmatpush1.msra.mxu0 0.0
  %897 = vmatprep.subr.mxu0 0.0
  %898 = vmatpush1.msra.mxu0 0.0
  %899 = vmatprep.mubr.f32.mxu0 0.0
  %900 = vmatmul.mubr.f32.gmra.mrb[0].mxu0 %v320
  %v901 = vpop.f32.mrb[0].mxu0
  %v902 = vadd.f32 %v261, %v901
  %v903 = vpop.f32.mrb[0].mxu0
  %v904 = vadd.f32 %v261, %v903
  %905 = vmatprep.mubr.f32.mxu0 0.0
  %906 = vmatmul.mubr.f32.gmra.mrb[0].mxu0 %v323
  %v907 = vpop.f32.mrb[0].mxu0
  %v908 = vadd.f32 %v266, %v907
  %v909 = vpop.f32.mrb[0].mxu0
  %v910 = vadd.f32 %v266, %v909
  %911 = vmatprep.mubr.f32.mxu0 0.0
  %912 = vmatmul.mubr.f32.gmra.mrb[0].mxu0 %v326
  %v913 = vpop.f32.mrb[0].mxu0
  %v914 = vadd.f32 %v271, %v913
  %v915 = vpop.f32.mrb[0].mxu0
  %v916 = vadd.f32 %v271, %v915
  %917 = vmatprep.mubr.f32.mxu0 0.0
  %918 = vmatmul.mubr.f32.gmra.mrb[0].mxu0 %v329
  %v919 = vpop.f32.mrb[0].mxu0
  %v920 = vadd.f32 %v276, %v919
  %v921 = vpop.f32.mrb[0].mxu0
  %v922 = vadd.f32 %v276, %v921
  %923 = vmatprep.mubr.f32.mxu0 0.0
  %924 = vmatmul.mubr.f32.gmra.mrb[0].mxu0 %v332
  %v925 = vpop.f32.mrb[0].mxu0
  %v926 = vadd.f32 %v281, %v925
  %v927 = vpop.f32.mrb[0].mxu0
  %v928 = vadd.f32 %v281, %v927
  %929 = vmatprep.mubr.f32.mxu0 0.0
  %930 = vmatmul.mubr.f32.gmra.mrb[0].mxu0 %v335
  %v931 = vpop.f32.mrb[0].mxu0
  %v932 = vadd.f32 %v286, %v931
  %v933 = vpop.f32.mrb[0].mxu0
  %v934 = vadd.f32 %v286, %v933
  %935 = vmatprep.mubr.f32.mxu0 0.0
  %936 = vmatmul.mubr.f32.gmra.mrb[0].mxu0 %v338
  %v937 = vpop.f32.mrb[0].mxu0
  %v938 = vadd.f32 %v291, %v937
  %v939 = vpop.f32.mrb[0].mxu0
  %v940 = vadd.f32 %v291, %v939
  %941 = vmatprep.mubr.f32.mxu0 0.0
  %942 = vmatmul.mubr.f32.gmra.mrb[0].mxu0 %v341
  %v943 = vpop.f32.mrb[0].mxu0
  %v944 = vadd.f32 %v296, %v943
  %v945 = vpop.f32.mrb[0].mxu0
  %v946 = vadd.f32 %v296, %v945
  %947 = vmatprep.mubr.f32.mxu0 0.0
  %948 = vmatmul.mubr.f32.gmra.mrb[0].mxu0 %v344
  %v949 = vpop.f32.mrb[0].mxu0
  %v950 = vadd.f32 %v301, %v949
  %v951 = vpop.f32.mrb[0].mxu0
  %v952 = vadd.f32 %v301, %v951
  %953 = vmatprep.mubr.f32.mxu0 0.0
  %954 = vmatmul.mubr.f32.gmra.mrb[0].mxu0 %v347
  %v955 = vpop.f32.mrb[0].mxu0
  %v956 = vadd.f32 %v306, %v955
  %v957 = vpop.f32.mrb[0].mxu0
  %v958 = vadd.f32 %v306, %v957
  %959 = vmatprep.mubr.f32.mxu0 0.0
  %960 = vmatmul.mubr.f32.gmra.mrb[0].mxu0 %v350
  %v961 = vpop.f32.mrb[0].mxu0
  %v962 = vadd.f32 %v311, %v961
  %v963 = vpop.f32.mrb[0].mxu0
  %v964 = vadd.f32 %v311, %v963
  %965 = vmatprep.mubr.f32.mxu0 0.0
  %966 = vmatmul.mubr.f32.gmra.mrb[0].mxu0 %v353
  %v967 = vpop.f32.mrb[0].mxu0
  %v968 = vadd.f32 %v316, %v967
  %v969 = vpop.f32.mrb[0].mxu0
  %v970 = vadd.f32 %v316, %v969
  %971 = vdwg.mxu0
  %v972 = vmax.f32 %v902, 0.0
  %v973 = vmax.f32 %v904, 0.0
  %v974 = vmax.f32 %v908, 0.0
  %v975 = vmax.f32 %v910, 0.0
  %v976 = vmax.f32 %v914, 0.0
  %v977 = vmax.f32 %v916, 0.0
  %v978 = vmax.f32 %v920, 0.0
  %v979 = vmax.f32 %v922, 0.0
  %v980 = vmax.f32 %v926, 0.0
  %v981 = vmax.f32 %v928, 0.0
  %v982 = vmax.f32 %v932, 0.0
  %v983 = vmax.f32 %v934, 0.0
  %v984 = vmax.f32 %v938, 0.0
  %v985 = vmax.f32 %v940, 0.0
  %v986 = vmax.f32 %v944, 0.0
  %v987 = vmax.f32 %v946, 0.0
  %v988 = vmax.f32 %v950, 0.0
  %v989 = vmax.f32 %v952, 0.0
  %v990 = vmax.f32 %v956, 0.0
  %v991 = vmax.f32 %v958, 0.0
  %v992 = vmax.f32 %v962, 0.0
  %v993 = vmax.f32 %v964, 0.0
  %v994 = vmax.f32 %v968, 0.0
  %v995 = vmax.f32 %v970, 0.0
  %996 = vmatprep.subr.mxu0 %v973
  %997 = vmatpush1.msra.mxu0 %v972
  %998 = vmatprep.subr.mxu0 %v975
  %999 = vmatpush1.msra.mxu0 %v974
  %1000 = vmatprep.subr.mxu0 %v977
  %1001 = vmatpush1.msra.mxu0 %v976
  %1002 = vmatprep.subr.mxu0 %v979
  %1003 = vmatpush1.msra.mxu0 %v978
  %1004 = vmatprep.subr.mxu0 %v981
  %1005 = vmatpush1.msra.mxu0 %v980
  %1006 = vmatprep.subr.mxu0 %v983
  %1007 = vmatpush1.msra.mxu0 %v982
  %1008 = vmatprep.subr.mxu0 %v985
  %1009 = vmatpush1.msra.mxu0 %v984
  %1010 = vmatprep.subr.mxu0 %v987
  %1011 = vmatpush1.msra.mxu0 %v986
  %1012 = vmatprep.subr.mxu0 %v989
  %1013 = vmatpush1.msra.mxu0 %v988
  %1014 = vmatprep.subr.mxu0 %v991
  %1015 = vmatpush1.msra.mxu0 %v990
  %1016 = vmatprep.subr.mxu0 %v993
  %1017 = vmatpush1.msra.mxu0 %v992
  %1018 = vmatprep.subr.mxu0 %v995
  %1019 = vmatpush1.msra.mxu0 %v994
  %1020 = vmatprep.subr.mxu0 0.0
  %1021 = vmatpush1.msra.mxu0 0.0
  %1022 = vmatprep.subr.mxu0 0.0
  %1023 = vmatpush1.msra.mxu0 0.0
  %1024 = vmatprep.subr.mxu0 0.0
  %1025 = vmatpush1.msra.mxu0 0.0
  %1026 = vmatprep.subr.mxu0 0.0
  %1027 = vmatpush1.msra.mxu0 0.0
  %1028 = vmatprep.subr.mxu0 0.0
  %1029 = vmatpush1.msra.mxu0 0.0
  %1030 = vmatprep.subr.mxu0 0.0
  %1031 = vmatpush1.msra.mxu0 0.0
  %1032 = vmatprep.subr.mxu0 0.0
  %1033 = vmatpush1.msra.mxu0 0.0
  %1034 = vmatprep.subr.mxu0 0.0
  %1035 = vmatpush1.msra.mxu0 0.0
  %1036 = vmatprep.subr.mxu0 0.0
  %1037 = vmatpush1.msra.mxu0 0.0
  %1038 = vmatprep.subr.mxu0 0.0
  %1039 = vmatpush1.msra.mxu0 0.0
  %1040 = vmatprep.subr.mxu0 0.0
  %1041 = vmatpush1.msra.mxu0 0.0
  %1042 = vmatprep.subr.mxu0 0.0
  %1043 = vmatpush1.msra.mxu0 0.0
  %1044 = vmatprep.subr.mxu0 0.0
  %1045 = vmatpush1.msra.mxu0 0.0
  %1046 = vmatprep.subr.mxu0 0.0
  %1047 = vmatpush1.msra.mxu0 0.0
  %1048 = vmatprep.subr.mxu0 0.0
  %1049 = vmatpush1.msra.mxu0 0.0
  %1050 = vmatprep.subr.mxu0 0.0
  %1051 = vmatpush1.msra.mxu0 0.0
  %1052 = vmatprep.subr.mxu0 0.0
  %1053 = vmatpush1.msra.mxu0 0.0
  %1054 = vmatprep.subr.mxu0 0.0
  %1055 = vmatpush1.msra.mxu0 0.0
  %1056 = vmatprep.subr.mxu0 0.0
  %1057 = vmatpush1.msra.mxu0 0.0
  %1058 = vmatprep.subr.mxu0 0.0
  %1059 = vmatpush1.msra.mxu0 0.0
  %1060 = vmatprep.mubr.f32.mxu0 0.0
  %1061 = vmatmul.mubr.f32.gmra.mrb[0].mxu0 %v524
  %v1062 = vpop.f32.mrb[0].mxu0
  %v1063 = vadd.f32 0.0, %v1062
  %v1064 = vpop.f32.mrb[0].mxu0
  %v1065 = vadd.f32 0.0, %v1064
  %1066 = vmatprep.mubr.f32.mxu0 0.0
  %1067 = vmatmul.mubr.f32.gmra.mrb[0].mxu0 %v527
  %v1068 = vpop.f32.mrb[0].mxu0
  %v1069 = vadd.f32 0.0, %v1068
  %v1070 = vpop.f32.mrb[0].mxu0
  %v1071 = vadd.f32 0.0, %v1070
  %1072 = vdwg.mxu0
  %s1073 = scalar_lea.vmem %s1, 2
  %v1074 = vld [vmem:[%s1073] sm:$0x3]
  %v1075 = vadd.f32 %v1074, 0.5
  %v1076 = vfloor.f32 %v1075
  %v1078 = vlaneseq
  %v1079 = vshrl.u32 %v1078, 7
  %v1080 = vsub.s32 0, %v1079
  %v1081 = vrot.slane %v1076, %v1080
  %v1082 = vlaneseq
  %v1083 = vshrl.u32 %v1082, 7
  %v1084 = vsub.s32 1, %v1083
  %v1085 = vrot.slane %v1076, %v1084
  %v1088 = vmul.f32 %v1063, %v1081
  %v1089 = vmul.f32 %v1065, %v1085
  %v1090 = vmul.f32 %v1069, %v1081
  %v1091 = vmul.f32 %v1071, %v1085
  %v1092 = vadd.f32 %v633, %v1088
  %v1093 = vadd.f32 %v634, %v1089
  %v1094 = vadd.f32 %v635, %v1090
  %v1095 = vadd.f32 %v636, %v1091
  %s1096 = scalar_lea.vmem %s5, 32
  %1097 = vst [vmem:[%s1096] sm:$0xff] %v1092
  %1098 = vst [vmem:[%s1096 + $0x8] sm:$0xff] %v1093
  %1099 = vst [vmem:[%s1096 + $0x10] sm:$0xf] %v1094
  %1100 = vst [vmem:[%s1096 + $0x18] sm:$0xf] %v1095
  // Predicated region
  $region22: #{_lambda_.1} parent=0 // pred_check
    _
  $region23: #{_lambda_.1} parent=0 // pred_check_branch
    %1102 = sbr.rel (0) target = $region25
  $region24: #{_lambda_.1} parent=0 // pred_region
    _
  $region25: #{_lambda_.1} parent=0 // pred_fallthru
    _
  // Predicated region
  $region26: #{_lambda_.1} parent=0 // pred_check
    _
  $region27: #{_lambda_.1} parent=0 // pred_check_branch
    %1104 = sbr.rel (0) target = $region29
  $region28: #{_lambda_.1} parent=0 // pred_region
    _
  $region29: #{_lambda_.1} parent=0 // pred_fallthru
    _

</llo_original>
